<compile_context>
chip_gen: v7x
topology: tpu7x:2x2x1
jax: 0.10.0
libtpu: 0.0.40
codegen_flags: <defaults>
</compile_context>

<pallas_src>
import jax
import jax.numpy as jnp
import numpy as np
from jax.experimental import pallas as pl
from jax.experimental.pallas import tpu as pltpu


def _se_kernel(x_ref, w1_ref, b1_ref, w2_ref, b2_ref, o_ref):
    # x block: (Bt, HW, C), channels on the lane axis.
    x = x_ref[...]

    # Squeeze: mean over the spatial (sublane) axis, accumulated in f32.
    pooled = jnp.mean(x, axis=1, dtype=jnp.float32)                  # (Bt, C)

    # Excite: fc1 (C -> Cr) + ReLU, fc2 (Cr -> C) + sigmoid, all in f32.
    h = jnp.dot(pooled, w1_ref[...],
                preferred_element_type=jnp.float32) + b1_ref[...]    # (Bt, Cr)
    h = jnp.maximum(h, 0.0)
    s = jnp.dot(h, w2_ref[...],
                preferred_element_type=jnp.float32) + b2_ref[...]    # (Bt, C)
    s = jax.nn.sigmoid(s)

    # Scale: per-(sample, channel) gate broadcast over the sublane (HW) axis.
    o_ref[...] = (x * s[:, None, :].astype(x.dtype)).astype(o_ref.dtype)


def _pick_batch_tile(n, bytes_per_sample, target_bytes=2 << 20, min_steps=2):
    """Largest divisor of n giving ~target_bytes x-tiles and >= min_steps grid steps."""
    bt = max(1, min(n, int(target_bytes) // max(int(bytes_per_sample), 1)))
    if n >= min_steps:
        bt = min(bt, n // min_steps)   # keep >= 2 parallel steps (v7x megacore)
    bt = max(bt, 1)
    while n % bt != 0:
        bt -= 1
    return bt


def se_block(x_nchw, w1, b1, w2, b2):
    """x_nchw: (N, C, H, W); w1: (Cr, C); b1: (Cr, 1); w2: (C, Cr); b2: (C, 1)."""
    N, C, H, W = x_nchw.shape
    Cr = w1.shape[0]
    HW = H * W
    dtype = x_nchw.dtype
    itemsize = jnp.dtype(dtype).itemsize

    # Lane-dense layout: (N, HW, C) with C on lanes (layout plumbing in XLA).
    x = jnp.transpose(x_nchw, (0, 2, 3, 1)).reshape(N, HW, C)

    # Pre-transpose weights so the FCs are right-multiplies; lane-major biases.
    w1t = jnp.asarray(w1, jnp.float32).T               # (C, Cr)
    w2t = jnp.asarray(w2, jnp.float32).T               # (Cr, C)
    b1r = jnp.asarray(b1, jnp.float32).reshape(1, Cr)  # (1, Cr)
    b2r = jnp.asarray(b2, jnp.float32).reshape(1, C)   # (1, C)

    bt = _pick_batch_tile(N, HW * C * itemsize)
    grid = (N // bt,)

    cost = pl.CostEstimate(
        flops=int(N * (2 * HW * C + 4 * C * Cr)),
        transcendentals=int(N * C),
        bytes_accessed=int(2 * N * HW * C * itemsize),
    )

    out = pl.pallas_call(
        _se_kernel,
        out_shape=jax.ShapeDtypeStruct((N, HW, C), dtype),
        grid_spec=pltpu.PrefetchScalarGridSpec(
            num_scalar_prefetch=0,
            grid=grid,
            in_specs=[
                pl.BlockSpec((bt, HW, C), lambda b: (b, 0, 0)),
                pl.BlockSpec((C, Cr), lambda b: (0, 0)),
                pl.BlockSpec((1, Cr), lambda b: (0, 0)),
                pl.BlockSpec((Cr, C), lambda b: (0, 0)),
                pl.BlockSpec((1, C), lambda b: (0, 0)),
            ],
            out_specs=pl.BlockSpec((bt, HW, C), lambda b: (b, 0, 0)),
        ),
        compiler_params=pltpu.CompilerParams(
            dimension_semantics=("parallel",)),
        cost_estimate=cost,
    )(x, w1t, b1r, w2t, b2r)

    return out.reshape(N, H, W, C).transpose(0, 3, 1, 2)


def se_block_ref(x, w1, b1, w2, b2):
    """Pure-JAX reference mirroring the PyTorch module (NCHW)."""
    pooled = jnp.mean(x, axis=(2, 3))                            # (N, C)
    h = jnp.maximum(pooled @ w1.T + b1.reshape(-1), 0.0)         # (N, Cr)
    s = jax.nn.sigmoid(h @ w2.T + b2.reshape(-1))                # (N, C)
    return x * s[:, :, None, None]


if __name__ == "__main__":
    # Small shapes consistent with the module: channels must be divisible by
    # reduction (=16), so use C=32 -> hidden Cr=2.
    N, C, H, W = 2, 32, 16, 16
    reduction = 16
    Cr = C // reduction

    key = jax.random.PRNGKey(0)
    kx, k1, kb1, k2, kb2 = jax.random.split(key, 5)

    x = jax.random.normal(kx, (N, C, H, W), dtype=jnp.float32)

    # Deterministic parameter init (1x1 conv weights == dense weights).
    bound1 = 1.0 / np.sqrt(C)
    w1 = jax.random.uniform(k1, (Cr, C), jnp.float32, -bound1, bound1)
    b1 = jax.random.uniform(kb1, (Cr, 1), jnp.float32, -bound1, bound1)
    bound2 = 1.0 / np.sqrt(Cr)
    w2 = jax.random.uniform(k2, (C, Cr), jnp.float32, -bound2, bound2)
    b2 = jax.random.uniform(kb2, (C, 1), jnp.float32, -bound2, bound2)

    out = se_block(x, w1, b1, w2, b2)
    out = jax.block_until_ready(out)

    ref = jax.block_until_ready(se_block_ref(x, w1, b1, w2, b2))
    np.testing.assert_allclose(np.asarray(out), np.asarray(ref),
                               rtol=1e-5, atol=1e-5)
    print("KERNEL_OK")
</pallas_src>

<mosaic_0001>
module attributes {stable_mosaic.version = 11 : i64} {
  func.func @_se_kernel(%arg0: i32, %arg1: memref<1x256x32xf32, #tpu.memory_space<vmem>>, %arg2: memref<32x2xf32, #tpu.memory_space<vmem>>, %arg3: memref<1x2xf32, #tpu.memory_space<vmem>>, %arg4: memref<2x32xf32, #tpu.memory_space<vmem>>, %arg5: memref<1x32xf32, #tpu.memory_space<vmem>>, %arg6: memref<1x256x32xf32, #tpu.memory_space<vmem>>) attributes {dimension_semantics = [#tpu.dimension_semantics<parallel>], iteration_bounds = array<i64: 2>, scalar_prefetch = 0 : i64, scratch_operands = 0 : i64, tpu.core_type = #tpu.core_type<tc>, window_params = [{transform_indices = @transform_0, window_bounds = array<i64: 1, 256, 32>}, {pipeline_mode = #tpu.pipeline_mode<synchronous>, transform_indices = @transform_1, window_bounds = array<i64: 32, 2>}, {pipeline_mode = #tpu.pipeline_mode<synchronous>, transform_indices = @transform_2, window_bounds = array<i64: 1, 2>}, {pipeline_mode = #tpu.pipeline_mode<synchronous>, transform_indices = @transform_3, window_bounds = array<i64: 2, 32>}, {pipeline_mode = #tpu.pipeline_mode<synchronous>, transform_indices = @transform_4, window_bounds = array<i64: 1, 32>}, {transform_indices = @transform_5, window_bounds = array<i64: 1, 256, 32>}]} {
    %c0 = arith.constant 0 : index
    %c0_0 = arith.constant 0 : index
    %c0_1 = arith.constant 0 : index
    %0 = vector.load %arg1[%c0, %c0_0, %c0_1] : memref<1x256x32xf32, #tpu.memory_space<vmem>>, vector<1x256x32xf32>
    %cst = arith.constant dense<0.000000e+00> : vector<1x32xf32>
    %1 = vector.multi_reduction <add>, %0, %cst [1] : vector<1x256x32xf32> to vector<1x32xf32>
    %cst_2 = arith.constant 2.560000e+02 : f32
    %2 = vector.broadcast %cst_2 : f32 to vector<1x32xf32>
    %3 = arith.divf %1, %2 : vector<1x32xf32>
    %c0_3 = arith.constant 0 : index
    %c0_4 = arith.constant 0 : index
    %4 = vector.load %arg2[%c0_3, %c0_4] : memref<32x2xf32, #tpu.memory_space<vmem>>, vector<32x2xf32>
    %cst_5 = arith.constant dense<0.000000e+00> : vector<1x2xf32>
    %5 = tpu.matmul %3, %4, %cst_5 {dimension_numbers = #tpu.dot_dimension_numbers<[1], [0], [0], [1], [0, 0, 1, 1], [], []>} : vector<1x32xf32>, vector<32x2xf32>, vector<1x2xf32> -> vector<1x2xf32>
    %c0_6 = arith.constant 0 : index
    %c0_7 = arith.constant 0 : index
    %6 = vector.load %arg3[%c0_6, %c0_7] : memref<1x2xf32, #tpu.memory_space<vmem>>, vector<1x2xf32>
    %7 = arith.addf %5, %6 : vector<1x2xf32>
    %cst_8 = arith.constant 0.000000e+00 : f32
    %8 = vector.broadcast %cst_8 : f32 to vector<1x2xf32>
    %9 = arith.maximumf %7, %8 : vector<1x2xf32>
    %c0_9 = arith.constant 0 : index
    %c0_10 = arith.constant 0 : index
    %10 = vector.load %arg4[%c0_9, %c0_10] : memref<2x32xf32, #tpu.memory_space<vmem>>, vector<2x32xf32>
    %cst_11 = arith.constant dense<0.000000e+00> : vector<1x32xf32>
    %11 = tpu.matmul %9, %10, %cst_11 {dimension_numbers = #tpu.dot_dimension_numbers<[1], [0], [0], [1], [0, 0, 1, 1], [], []>} : vector<1x2xf32>, vector<2x32xf32>, vector<1x32xf32> -> vector<1x32xf32>
    %c0_12 = arith.constant 0 : index
    %c0_13 = arith.constant 0 : index
    %12 = vector.load %arg5[%c0_12, %c0_13] : memref<1x32xf32, #tpu.memory_space<vmem>>, vector<1x32xf32>
    %13 = arith.addf %11, %12 : vector<1x32xf32>
    %14 = arith.negf %13 : vector<1x32xf32>
    %15 = math.exp %14 : vector<1x32xf32>
    %cst_14 = arith.constant 1.000000e+00 : f32
    %16 = vector.broadcast %cst_14 : f32 to vector<1x32xf32>
    %17 = arith.addf %16, %15 : vector<1x32xf32>
    %18 = arith.divf %16, %17 : vector<1x32xf32>
    %19 = vector.shape_cast %18 : vector<1x32xf32> to vector<1x1x32xf32>
    %20 = vector.broadcast %19 : vector<1x1x32xf32> to vector<1x256x32xf32>
    %21 = arith.mulf %0, %20 : vector<1x256x32xf32>
    %c0_15 = arith.constant 0 : index
    %c0_16 = arith.constant 0 : index
    %c0_17 = arith.constant 0 : index
    %22 = vector.load %arg6[%c0_15, %c0_16, %c0_17] : memref<1x256x32xf32, #tpu.memory_space<vmem>>, vector<1x256x32xf32>
    tpu.vector_store %arg6[%c0_15, %c0_16, %c0_17], %21 {strides = array<i32>} : memref<1x256x32xf32, #tpu.memory_space<vmem>>, vector<1x256x32xf32>,
    return
  }
  func.func @transform_0(%arg0: i32) -> (i32, i32, i32) {
    %c0_i32 = arith.constant 0 : i32
    %c0_i32_0 = arith.constant 0 : i32
    %c0_i32_1 = arith.constant 0 : i32
    return %arg0, %c0_i32, %c0_i32_0 : i32, i32, i32
  }
  func.func @transform_1(%arg0: i32) -> (i32, i32) {
    %c0_i32 = arith.constant 0 : i32
    %c0_i32_0 = arith.constant 0 : i32
    %c0_i32_1 = arith.constant 0 : i32
    return %c0_i32, %c0_i32_0 : i32, i32
  }
  func.func @transform_2(%arg0: i32) -> (i32, i32) {
    %c0_i32 = arith.constant 0 : i32
    %c0_i32_0 = arith.constant 0 : i32
    %c0_i32_1 = arith.constant 0 : i32
    return %c0_i32, %c0_i32_0 : i32, i32
  }
  func.func @transform_3(%arg0: i32) -> (i32, i32) {
    %c0_i32 = arith.constant 0 : i32
    %c0_i32_0 = arith.constant 0 : i32
    %c0_i32_1 = arith.constant 0 : i32
    return %c0_i32, %c0_i32_0 : i32, i32
  }
  func.func @transform_4(%arg0: i32) -> (i32, i32) {
    %c0_i32 = arith.constant 0 : i32
    %c0_i32_0 = arith.constant 0 : i32
    %c0_i32_1 = arith.constant 0 : i32
    return %c0_i32, %c0_i32_0 : i32, i32
  }
  func.func @transform_5(%arg0: i32) -> (i32, i32, i32) {
    %c0_i32 = arith.constant 0 : i32
    %c0_i32_0 = arith.constant 0 : i32
    %c0_i32_1 = arith.constant 0 : i32
    return %arg0, %c0_i32, %c0_i32_0 : i32, i32, i32
  }
}

</mosaic_0001>

<llo_original>
// kernel: tpu_custom_call.1
$region0: #{tpu_custom_call.1}
  #allocation0 [shape = 'u32[]', space=smem, size = 0x4, offset = 0x4, fixed_abs, tag = 'smem constant byte address 0x4 - core index']
  #allocation1 [shape = 'u32[144,128]{1,0:T(1,128)}', space=vmem, size = 0x12000, scoped, tag = 'internal scratch']
  %s0 = inlined_call_operand.vmem [shape: f32[2,256,32], index: 0, kind: input, shape index: {}]
  %s1 = inlined_call_operand.vmem [shape: f32[32,2], index: 1, kind: input, shape index: {}]
  %s2 = inlined_call_operand.vmem [shape: f32[1,2], index: 2, kind: input, shape index: {}]
  %s3 = inlined_call_operand.vmem [shape: f32[2,32], index: 3, kind: input, shape index: {}]
  %s4 = inlined_call_operand.vmem [shape: f32[1,32], index: 4, kind: input, shape index: {}]
  %s5 = inlined_call_operand.vmem [shape: f32[2,256,32], index: 5, kind: output, shape index: {}]
  %s6 = sld [smem:[#allocation0]]
  $region53: #{tpu_custom_call.1} parent=0
    _
  %s8 = ssub.s32 1, %s6
  %s9 = scalar_select 0, %s8, %s6
  loop: start=0, step=1, limit=4
  $region2: #{tpu_custom_call.1} parent=0 // loop_pre_header
    _
  $region3: #{tpu_custom_call.1} parent=0 // loop_header
    %s11 = sphi 0, %s15
    %p12 = scmp.ge.s32.totalorder %s11, 4
    %s21 = sphi 0, %s23
    %s24 = sphi 0, %s21
    %s25 = sphi 0, %s24
    %s41 = sphi 0, %s25
    %s45 = sphi 0, %s45
    %s47 = sphi 0, %s45
    %s48 = sphi 0, %s47
    %s62 = sphi 0, %s48
    %s66 = sphi 0, %s66
    %s68 = sphi 0, %s66
    %s69 = sphi 0, %s68
    %s83 = sphi 0, %s69
    %s87 = sphi 0, %s87
    %s89 = sphi 0, %s87
    %s90 = sphi 0, %s89
    %s104 = sphi 0, %s90
    %s108 = sphi 0, %s108
    %s110 = sphi 0, %s108
    %s111 = sphi 0, %s110
    %s125 = sphi 0, %s111
    %s131 = sphi 0, %s133
    %s134 = sphi 0, %s131
    %s135 = sphi 0, %s134
    %s151 = sphi 0, %s135
  $region4: #{tpu_custom_call.1} parent=0 // loop_header_branch
    %14 = sbr.rel (%p12) target = $region8
  $region5: #{tpu_custom_call.1} parent=0 // loop_body
    %s16 = ssub.s32 %s11, 1
    %s17 = ssub.s32 %s11, 2
    %s18 = sadd.s32 %s11, 1
    %s19 = ssub.s32 %s11, %s18
    %p20 = scmp.eq.s32.totalorder %s19, 0
    %s22 = sadd.s32 %s21, 1
    %s23 = scalar_select %p20, %s21, %s22
    %p26 = pneg %p20
    %p27 = scmp.eq.s32.totalorder %s11, 1
    %p28 = por %p26, %p27
    %p29 = scmp.ne.s32.totalorder %s21, %s24
    %p30 = scmp.eq.s32.totalorder %s11, 0
    %p31 = por %p29, %p30
    %p32 = scmp.ne.s32.totalorder %s21, %s24
    %p33 = scmp.eq.s32.totalorder %s16, 1
    %p34 = por %p32, %p33
    %p35 = scmp.ne.s32.totalorder %s24, %s25
    %p36 = scmp.eq.s32.totalorder %s16, 0
    %p37 = por %p35, %p36
    %p38 = scmp.ne.s32.totalorder %s24, %s25
    %p39 = scmp.eq.s32.totalorder %s17, 1
    %p40 = por %p38, %p39
    %p42 = scmp.ne.s32.totalorder %s25, %s41
    %p43 = scmp.eq.s32.totalorder %s17, 0
    %p44 = por %p42, %p43
    %s46 = sadd.s32 %s45, 1
    %p49 = scmp.eq.s32.totalorder %s11, 1
    %p50 = scmp.ne.s32.totalorder %s45, %s47
    %p51 = scmp.eq.s32.totalorder %s11, 0
    %p52 = por %p50, %p51
    %p53 = scmp.ne.s32.totalorder %s45, %s47
    %p54 = scmp.eq.s32.totalorder %s16, 1
    %p55 = por %p53, %p54
    %p56 = scmp.ne.s32.totalorder %s47, %s48
    %p57 = scmp.eq.s32.totalorder %s16, 0
    %p58 = por %p56, %p57
    %p59 = scmp.ne.s32.totalorder %s47, %s48
    %p60 = scmp.eq.s32.totalorder %s17, 1
    %p61 = por %p59, %p60
    %p63 = scmp.ne.s32.totalorder %s48, %s62
    %p64 = scmp.eq.s32.totalorder %s17, 0
    %p65 = por %p63, %p64
    %s67 = sadd.s32 %s66, 1
    %p70 = scmp.eq.s32.totalorder %s11, 1
    %p71 = scmp.ne.s32.totalorder %s66, %s68
    %p72 = scmp.eq.s32.totalorder %s11, 0
    %p73 = por %p71, %p72
    %p74 = scmp.ne.s32.totalorder %s66, %s68
    %p75 = scmp.eq.s32.totalorder %s16, 1
    %p76 = por %p74, %p75
    %p77 = scmp.ne.s32.totalorder %s68, %s69
    %p78 = scmp.eq.s32.totalorder %s16, 0
    %p79 = por %p77, %p78
    %p80 = scmp.ne.s32.totalorder %s68, %s69
    %p81 = scmp.eq.s32.totalorder %s17, 1
    %p82 = por %p80, %p81
    %p84 = scmp.ne.s32.totalorder %s69, %s83
    %p85 = scmp.eq.s32.totalorder %s17, 0
    %p86 = por %p84, %p85
    %s88 = sadd.s32 %s87, 1
    %p91 = scmp.eq.s32.totalorder %s11, 1
    %p92 = scmp.ne.s32.totalorder %s87, %s89
    %p93 = scmp.eq.s32.totalorder %s11, 0
    %p94 = por %p92, %p93
    %p95 = scmp.ne.s32.totalorder %s87, %s89
    %p96 = scmp.eq.s32.totalorder %s16, 1
    %p97 = por %p95, %p96
    %p98 = scmp.ne.s32.totalorder %s89, %s90
    %p99 = scmp.eq.s32.totalorder %s16, 0
    %p100 = por %p98, %p99
    %p101 = scmp.ne.s32.totalorder %s89, %s90
    %p102 = scmp.eq.s32.totalorder %s17, 1
    %p103 = por %p101, %p102
    %p105 = scmp.ne.s32.totalorder %s90, %s104
    %p106 = scmp.eq.s32.totalorder %s17, 0
    %p107 = por %p105, %p106
    %s109 = sadd.s32 %s108, 1
    %p112 = scmp.eq.s32.totalorder %s11, 1
    %p113 = scmp.ne.s32.totalorder %s108, %s110
    %p114 = scmp.eq.s32.totalorder %s11, 0
    %p115 = por %p113, %p114
    %p116 = scmp.ne.s32.totalorder %s108, %s110
    %p117 = scmp.eq.s32.totalorder %s16, 1
    %p118 = por %p116, %p117
    %p119 = scmp.ne.s32.totalorder %s110, %s111
    %p120 = scmp.eq.s32.totalorder %s16, 0
    %p121 = por %p119, %p120
    %p122 = scmp.ne.s32.totalorder %s110, %s111
    %p123 = scmp.eq.s32.totalorder %s17, 1
    %p124 = por %p122, %p123
    %p126 = scmp.ne.s32.totalorder %s111, %s125
    %p127 = scmp.eq.s32.totalorder %s17, 0
    %p128 = por %p126, %p127
    %s129 = ssub.s32 %s11, %s18
    %p130 = scmp.eq.s32.totalorder %s129, 0
    %s132 = sadd.s32 %s131, 1
    %s133 = scalar_select %p130, %s131, %s132
    %p136 = pneg %p130
    %p137 = scmp.eq.s32.totalorder %s11, 1
    %p138 = por %p136, %p137
    %p139 = scmp.ne.s32.totalorder %s131, %s134
    %p140 = scmp.eq.s32.totalorder %s11, 0
    %p141 = por %p139, %p140
    %p142 = scmp.ne.s32.totalorder %s131, %s134
    %p143 = scmp.eq.s32.totalorder %s16, 1
    %p144 = por %p142, %p143
    %p145 = scmp.ne.s32.totalorder %s134, %s135
    %p146 = scmp.eq.s32.totalorder %s16, 0
    %p147 = por %p145, %p146
    %p148 = scmp.ne.s32.totalorder %s134, %s135
    %p149 = scmp.eq.s32.totalorder %s17, 1
    %p150 = por %p148, %p149
    %p152 = scmp.ne.s32.totalorder %s135, %s151
    %p153 = scmp.eq.s32.totalorder %s17, 0
    %p154 = por %p152, %p153
    %p155 = scmp.le.s32.totalorder 1, %s11
    %p156 = scmp.lt.s32.totalorder %s11, 3
    %p157 = pnand %p155, %p156
    %p158 = pneg %p157
    // Predicated region
    $region9: #{tpu_custom_call.1} parent=5 // pred_check
      _
    $region10: #{tpu_custom_call.1} parent=5 // pred_check_branch
      %160 = sbr.rel (%p157) target = $region12
    $region11: #{tpu_custom_call.1} parent=5 // pred_region
      %s161 = ssub.s32 %s11, 1
      // Predicated region
      $region13: #{tpu_custom_call.1} parent=11 // pred_check
        %p162 = pneg %p58
      $region14: #{tpu_custom_call.1} parent=11 // pred_check_branch
        %164 = sbr.rel (%p162) target = $region16
      $region15: #{tpu_custom_call.1} parent=11 // pred_region
        _
      $region16: #{tpu_custom_call.1} parent=11 // pred_fallthru
        _
      // Predicated region
      $region17: #{tpu_custom_call.1} parent=11 // pred_check
        %p165 = pneg %p79
      $region18: #{tpu_custom_call.1} parent=11 // pred_check_branch
        %167 = sbr.rel (%p165) target = $region20
      $region19: #{tpu_custom_call.1} parent=11 // pred_region
        _
      $region20: #{tpu_custom_call.1} parent=11 // pred_fallthru
        _
      // Predicated region
      $region21: #{tpu_custom_call.1} parent=11 // pred_check
        %p168 = pneg %p100
      $region22: #{tpu_custom_call.1} parent=11 // pred_check_branch
        %170 = sbr.rel (%p168) target = $region24
      $region23: #{tpu_custom_call.1} parent=11 // pred_region
        _
      $region24: #{tpu_custom_call.1} parent=11 // pred_fallthru
        _
      // Predicated region
      $region25: #{tpu_custom_call.1} parent=11 // pred_check
        %p171 = pneg %p121
      $region26: #{tpu_custom_call.1} parent=11 // pred_check_branch
        %173 = sbr.rel (%p171) target = $region28
      $region27: #{tpu_custom_call.1} parent=11 // pred_region
        _
      $region28: #{tpu_custom_call.1} parent=11 // pred_fallthru
        _
    $region12: #{tpu_custom_call.1} parent=5 // pred_fallthru
      _
    %p174 = scmp.lt.s32.totalorder %s11, 2
    // Predicated region
    $region29: #{tpu_custom_call.1} parent=5 // pred_check
      %p175 = pneg %p174
    $region30: #{tpu_custom_call.1} parent=5 // pred_check_branch
      %177 = sbr.rel (%p175) target = $region32
    $region31: #{tpu_custom_call.1} parent=5 // pred_region
      // Predicated region
      $region33: #{tpu_custom_call.1} parent=31 // pred_check
        %p178 = pneg %p31
      $region34: #{tpu_custom_call.1} parent=31 // pred_check_branch
        %180 = sbr.rel (%p178) target = $region36
      $region35: #{tpu_custom_call.1} parent=31 // pred_region
        %p181 = scmp.lt.s32.totalorder %s11, 1
        %s182 = scalar_select %p181, %s11, 1
        %s183 = smul.addr %s182, 32
        %s184 = smul.addr %s183, 8
        %s185 = scalar_lea.vmem %s0, %s184
      $region36: #{tpu_custom_call.1} parent=31 // pred_fallthru
        _
    $region32: #{tpu_custom_call.1} parent=5 // pred_fallthru
      _
    %p186 = scmp.le.s32.totalorder 1, %s11
    %p187 = scmp.lt.s32.totalorder %s11, 3
    %p188 = pnand %p186, %p187
    %p189 = pneg %p188
    // Predicated region
    $region37: #{tpu_custom_call.1} parent=5 // pred_check
      _
    $region38: #{tpu_custom_call.1} parent=5 // pred_check_branch
      %191 = sbr.rel (%p188) target = $region40
    $region39: #{tpu_custom_call.1} parent=5 // pred_region
      %s192 = ssub.s32 %s11, 1
      %p193 = scmp.lt.s32.totalorder %s16, 1
      %s194 = scalar_select %p193, %s16, 1
      %s195 = smul.addr %s194, 32
      %s196 = smul.addr %s195, 8
      %s197 = scalar_lea.vmem %s0, %s196
      %p198 = pneg %p37
      %p199 = pneg %p34
      %p200 = pneg %p58
      %p201 = pneg %p55
      %p202 = pneg %p79
      %p203 = pneg %p76
      %p204 = pneg %p100
      %p205 = pneg %p97
      %p206 = pneg %p121
      %p207 = pneg %p118
      %p208 = pneg %p147
      %p209 = pneg %p144
      %p210 = scmp.lt.s32.totalorder %s16, 1
      %s211 = scalar_select %p210, %s16, 1
      %s212 = smul.addr %s211, 32
      %s213 = smul.addr %s212, 8
      %s214 = scalar_lea.vmem %s5, %s213
      %p215 = scmp.lt.s32.totalorder %s16, 1
      %s216 = scalar_select %p215, %s16, 1
      %s217 = smul.addr %s216, 32
      %s218 = smul.addr %s217, 8
      %s219 = scalar_lea.vmem %s0, %s218
      %p220 = scmp.lt.s32.totalorder %s16, 1
      %s221 = scalar_select %p220, %s16, 1
      %s222 = smul.addr %s221, 32
      %s223 = smul.addr %s222, 8
      %s224 = scalar_lea.vmem %s5, %s223
      %v225 = vld [vmem:[%s219] sm:$0xff]
      %v226 = vld [vmem:[%s219 + $0x8] sm:$0xff]
      %v227 = vld [vmem:[%s219 + $0x10] sm:$0xff]
      %v228 = vld [vmem:[%s219 + $0x18] sm:$0xff]
      %v229 = vld [vmem:[%s219 + $0x20] sm:$0xff]
      %v230 = vld [vmem:[%s219 + $0x28] sm:$0xff]
      %v231 = vld [vmem:[%s219 + $0x30] sm:$0xff]
      %v232 = vld [vmem:[%s219 + $0x38] sm:$0xff]
      %v233 = vld [vmem:[%s219 + $0x40] sm:$0xff]
      %v234 = vld [vmem:[%s219 + $0x48] sm:$0xff]
      %v235 = vld [vmem:[%s219 + $0x50] sm:$0xff]
      %v236 = vld [vmem:[%s219 + $0x58] sm:$0xff]
      %v237 = vld [vmem:[%s219 + $0x60] sm:$0xff]
      %v238 = vld [vmem:[%s219 + $0x68] sm:$0xff]
      %v239 = vld [vmem:[%s219 + $0x70] sm:$0xff]
      %v240 = vld [vmem:[%s219 + $0x78] sm:$0xff]
      %v241 = vld [vmem:[%s219 + $0x80] sm:$0xff]
      %v242 = vld [vmem:[%s219 + $0x88] sm:$0xff]
      %v243 = vld [vmem:[%s219 + $0x90] sm:$0xff]
      %v244 = vld [vmem:[%s219 + $0x98] sm:$0xff]
      %v245 = vld [vmem:[%s219 + $0xa0] sm:$0xff]
      %v246 = vld [vmem:[%s219 + $0xa8] sm:$0xff]
      %v247 = vld [vmem:[%s219 + $0xb0] sm:$0xff]
      %v248 = vld [vmem:[%s219 + $0xb8] sm:$0xff]
      %v249 = vld [vmem:[%s219 + $0xc0] sm:$0xff]
      %v250 = vld [vmem:[%s219 + $0xc8] sm:$0xff]
      %v251 = vld [vmem:[%s219 + $0xd0] sm:$0xff]
      %v252 = vld [vmem:[%s219 + $0xd8] sm:$0xff]
      %v253 = vld [vmem:[%s219 + $0xe0] sm:$0xff]
      %v254 = vld [vmem:[%s219 + $0xe8] sm:$0xff]
      %v255 = vld [vmem:[%s219 + $0xf0] sm:$0xff]
      %v256 = vld [vmem:[%s219 + $0xf8] sm:$0xff]
      %vm257 = vcmask 261120
      %v258 = vsel %vm257, %v225, 0.0
      %v259 = vsel %vm257, %v226, 0.0
      %v260 = vadd.f32 %v258, %v259
      %v261 = vsel %vm257, %v227, 0.0
      %v262 = vadd.f32 %v260, %v261
      %v263 = vsel %vm257, %v228, 0.0
      %v264 = vadd.f32 %v262, %v263
      %v265 = vsel %vm257, %v229, 0.0
      %v266 = vadd.f32 %v264, %v265
      %v267 = vsel %vm257, %v230, 0.0
      %v268 = vadd.f32 %v266, %v267
      %v269 = vsel %vm257, %v231, 0.0
      %v270 = vadd.f32 %v268, %v269
      %v271 = vsel %vm257, %v232, 0.0
      %v272 = vadd.f32 %v270, %v271
      %v273 = vsel %vm257, %v233, 0.0
      %v274 = vadd.f32 %v272, %v273
      %v275 = vsel %vm257, %v234, 0.0
      %v276 = vadd.f32 %v274, %v275
      %v277 = vsel %vm257, %v235, 0.0
      %v278 = vadd.f32 %v276, %v277
      %v279 = vsel %vm257, %v236, 0.0
      %v280 = vadd.f32 %v278, %v279
      %v281 = vsel %vm257, %v237, 0.0
      %v282 = vadd.f32 %v280, %v281
      %v283 = vsel %vm257, %v238, 0.0
      %v284 = vadd.f32 %v282, %v283
      %v285 = vsel %vm257, %v239, 0.0
      %v286 = vadd.f32 %v284, %v285
      %v287 = vsel %vm257, %v240, 0.0
      %v288 = vadd.f32 %v286, %v287
      %v289 = vsel %vm257, %v241, 0.0
      %v290 = vadd.f32 %v288, %v289
      %v291 = vsel %vm257, %v242, 0.0
      %v292 = vadd.f32 %v290, %v291
      %v293 = vsel %vm257, %v243, 0.0
      %v294 = vadd.f32 %v292, %v293
      %v295 = vsel %vm257, %v244, 0.0
      %v296 = vadd.f32 %v294, %v295
      %v297 = vsel %vm257, %v245, 0.0
      %v298 = vadd.f32 %v296, %v297
      %v299 = vsel %vm257, %v246, 0.0
      %v300 = vadd.f32 %v298, %v299
      %v301 = vsel %vm257, %v247, 0.0
      %v302 = vadd.f32 %v300, %v301
      %v303 = vsel %vm257, %v248, 0.0
      %v304 = vadd.f32 %v302, %v303
      %v305 = vsel %vm257, %v249, 0.0
      %v306 = vadd.f32 %v304, %v305
      %v307 = vsel %vm257, %v250, 0.0
      %v308 = vadd.f32 %v306, %v307
      %v309 = vsel %vm257, %v251, 0.0
      %v310 = vadd.f32 %v308, %v309
      %v311 = vsel %vm257, %v252, 0.0
      %v312 = vadd.f32 %v310, %v311
      %v313 = vsel %vm257, %v253, 0.0
      %v314 = vadd.f32 %v312, %v313
      %v315 = vsel %vm257, %v254, 0.0
      %v316 = vadd.f32 %v314, %v315
      %v317 = vsel %vm257, %v255, 0.0
      %v318 = vadd.f32 %v316, %v317
      %v319 = vsel %vm257, %v256, 0.0
      %v320 = vadd.f32 %v318, %v319
      %v321 = vrot.slane %v320, 4
      %v322 = vadd.f32 %v320, %v321
      %v323 = vrot.slane %v322, 2
      %v324 = vadd.f32 %v322, %v323
      %v325 = vrot.slane %v324, 1
      %v326 = vadd.f32 %v324, %v325
      %v327 = vrcp.pop 256.0
      %v328 = vmul.f32 %v326, %v327
      %v329 = vld [vmem:[%s1] sm:$0xff]
      %v330 = vld [vmem:[%s1 + $0x8] sm:$0xff]
      %v331 = vld [vmem:[%s1 + $0x10] sm:$0xff]
      %v332 = vld [vmem:[%s1 + $0x18] sm:$0xff]
      %v333 = vld [vmem:[%s2] sm:$0x1]
      %v335 = vsel %vm257, %v328, 0
      %337 = vmatprep.subr.mxu0 0.0
      %338 = vmatpush1.msra.mxu0 %v329
      %339 = vmatprep.subr.mxu0 0.0
      %340 = vmatpush1.msra.mxu0 %v330
      %341 = vmatprep.subr.mxu0 0.0
      %342 = vmatpush1.msra.mxu0 %v331
      %343 = vmatprep.subr.mxu0 0.0
      %344 = vmatpush1.msra.mxu0 %v332
      %345 = vmatprep.subr.mxu0 0.0
      %346 = vmatpush1.msra.mxu0 0.0
      %347 = vmatprep.subr.mxu0 0.0
      %348 = vmatpush1.msra.mxu0 0.0
      %349 = vmatprep.subr.mxu0 0.0
      %350 = vmatpush1.msra.mxu0 0.0
      %351 = vmatprep.subr.mxu0 0.0
      %352 = vmatpush1.msra.mxu0 0.0
      %353 = vmatprep.subr.mxu0 0.0
      %354 = vmatpush1.msra.mxu0 0.0
      %355 = vmatprep.subr.mxu0 0.0
      %356 = vmatpush1.msra.mxu0 0.0
      %357 = vmatprep.subr.mxu0 0.0
      %358 = vmatpush1.msra.mxu0 0.0
      %359 = vmatprep.subr.mxu0 0.0
      %360 = vmatpush1.msra.mxu0 0.0
      %361 = vmatprep.subr.mxu0 0.0
      %362 = vmatpush1.msra.mxu0 0.0
      %363 = vmatprep.subr.mxu0 0.0
      %364 = vmatpush1.msra.mxu0 0.0
      %365 = vmatprep.subr.mxu0 0.0
      %366 = vmatpush1.msra.mxu0 0.0
      %367 = vmatprep.subr.mxu0 0.0
      %368 = vmatpush1.msra.mxu0 0.0
      %369 = vmatprep.subr.mxu0 0.0
      %370 = vmatpush1.msra.mxu0 0.0
      %371 = vmatprep.subr.mxu0 0.0
      %372 = vmatpush1.msra.mxu0 0.0
      %373 = vmatprep.subr.mxu0 0.0
      %374 = vmatpush1.msra.mxu0 0.0
      %375 = vmatprep.subr.mxu0 0.0
      %376 = vmatpush1.msra.mxu0 0.0
      %377 = vmatprep.subr.mxu0 0.0
      %378 = vmatpush1.msra.mxu0 0.0
      %379 = vmatprep.subr.mxu0 0.0
      %380 = vmatpush1.msra.mxu0 0.0
      %381 = vmatprep.subr.mxu0 0.0
      %382 = vmatpush1.msra.mxu0 0.0
      %383 = vmatprep.subr.mxu0 0.0
      %384 = vmatpush1.msra.mxu0 0.0
      %385 = vmatprep.subr.mxu0 0.0
      %386 = vmatpush1.msra.mxu0 0.0
      %387 = vmatprep.subr.mxu0 0.0
      %388 = vmatpush1.msra.mxu0 0.0
      %389 = vmatprep.subr.mxu0 0.0
      %390 = vmatpush1.msra.mxu0 0.0
      %391 = vmatprep.subr.mxu0 0.0
      %392 = vmatpush1.msra.mxu0 0.0
      %393 = vmatprep.subr.mxu0 0.0
      %394 = vmatpush1.msra.mxu0 0.0
      %395 = vmatprep.subr.mxu0 0.0
      %396 = vmatpush1.msra.mxu0 0.0
      %397 = vmatprep.subr.mxu0 0.0
      %398 = vmatpush1.msra.mxu0 0.0
      %399 = vmatprep.subr.mxu0 0.0
      %400 = vmatpush1.msra.mxu0 0.0
      %401 = vmatprep.mubr.f32.mxu0 0.0
      %402 = vmatmul.mubr.f32.gmra.mrb[0].mxu0 %v335
      %v403 = vpop.f32.mrb[0].mxu0
      %v404 = vadd.f32 %v333, %v403
      %v405 = vpop.f32.mrb[0].mxu0
      %406 = vdwg.mxu0
      %v407 = vmax.f32 %v404, 0.0
      %v408 = vld [vmem:[%s3] sm:$0x3]
      %v409 = vld [vmem:[%s4] sm:$0x1]
      %vm410 = vcmask 15360
      %v412 = vsel %vm410, %v407, 0
      %vm414 = vcmask 1041408
      %v416 = vsel %vm414, %v408, 0
      %418 = vmatprep.subr.mxu0 0.0
      %419 = vmatpush1.msra.mxu0 %v416
      %420 = vmatprep.subr.mxu0 0.0
      %421 = vmatpush1.msra.mxu0 0.0
      %422 = vmatprep.subr.mxu0 0.0
      %423 = vmatpush1.msra.mxu0 0.0
      %424 = vmatprep.subr.mxu0 0.0
      %425 = vmatpush1.msra.mxu0 0.0
      %426 = vmatprep.subr.mxu0 0.0
      %427 = vmatpush1.msra.mxu0 0.0
      %428 = vmatprep.subr.mxu0 0.0
      %429 = vmatpush1.msra.mxu0 0.0
      %430 = vmatprep.subr.mxu0 0.0
      %431 = vmatpush1.msra.mxu0 0.0
      %432 = vmatprep.subr.mxu0 0.0
      %433 = vmatpush1.msra.mxu0 0.0
      %434 = vmatprep.subr.mxu0 0.0
      %435 = vmatpush1.msra.mxu0 0.0
      %436 = vmatprep.subr.mxu0 0.0
      %437 = vmatpush1.msra.mxu0 0.0
      %438 = vmatprep.subr.mxu0 0.0
      %439 = vmatpush1.msra.mxu0 0.0
      %440 = vmatprep.subr.mxu0 0.0
      %441 = vmatpush1.msra.mxu0 0.0
      %442 = vmatprep.subr.mxu0 0.0
      %443 = vmatpush1.msra.mxu0 0.0
      %444 = vmatprep.subr.mxu0 0.0
      %445 = vmatpush1.msra.mxu0 0.0
      %446 = vmatprep.subr.mxu0 0.0
      %447 = vmatpush1.msra.mxu0 0.0
      %448 = vmatprep.subr.mxu0 0.0
      %449 = vmatpush1.msra.mxu0 0.0
      %450 = vmatprep.subr.mxu0 0.0
      %451 = vmatpush1.msra.mxu0 0.0
      %452 = vmatprep.subr.mxu0 0.0
      %453 = vmatpush1.msra.mxu0 0.0
      %454 = vmatprep.subr.mxu0 0.0
      %455 = vmatpush1.msra.mxu0 0.0
      %456 = vmatprep.subr.mxu0 0.0
      %457 = vmatpush1.msra.mxu0 0.0
      %458 = vmatprep.subr.mxu0 0.0
      %459 = vmatpush1.msra.mxu0 0.0
      %460 = vmatprep.subr.mxu0 0.0
      %461 = vmatpush1.msra.mxu0 0.0
      %462 = vmatprep.subr.mxu0 0.0
      %463 = vmatpush1.msra.mxu0 0.0
      %464 = vmatprep.subr.mxu0 0.0
      %465 = vmatpush1.msra.mxu0 0.0
      %466 = vmatprep.subr.mxu0 0.0
      %467 = vmatpush1.msra.mxu0 0.0
      %468 = vmatprep.subr.mxu0 0.0
      %469 = vmatpush1.msra.mxu0 0.0
      %470 = vmatprep.subr.mxu0 0.0
      %471 = vmatpush1.msra.mxu0 0.0
      %472 = vmatprep.subr.mxu0 0.0
      %473 = vmatpush1.msra.mxu0 0.0
      %474 = vmatprep.subr.mxu0 0.0
      %475 = vmatpush1.msra.mxu0 0.0
      %476 = vmatprep.subr.mxu0 0.0
      %477 = vmatpush1.msra.mxu0 0.0
      %478 = vmatprep.subr.mxu0 0.0
      %479 = vmatpush1.msra.mxu0 0.0
      %480 = vmatprep.subr.mxu0 0.0
      %481 = vmatpush1.msra.mxu0 0.0
      %482 = vmatprep.mubr.f32.mxu0 0.0
      %483 = vmatmul.mubr.f32.gmra.mrb[0].mxu0 %v412
      %v484 = vpop.f32.mrb[0].mxu0
      %v485 = vadd.f32 %v409, %v484
      %v486 = vpop.f32.mrb[0].mxu0
      %487 = vdwg.mxu0
      %v488 = vxor.u32 %v485, 2147483648
      %v489 = vmul.f32 %v488, 1.442695
      %v490 = vpow.pop %v489
      %v491 = vadd.f32 %v490, 1.0
      %v492 = vrcp.pop %v491
      %v493 = vmul.f32 1.0, %v492
      %v494 = vlaneseq
      %v495 = vshrl.u32 %v494, 7
      %v496 = vsub.s32 0, %v495
      %v497 = vrot.slane %v493, %v496
      %v498 = vmul.f32 %v225, %v497
      %v499 = vmul.f32 %v226, %v497
      %v500 = vmul.f32 %v227, %v497
      %v501 = vmul.f32 %v228, %v497
      %v502 = vmul.f32 %v229, %v497
      %v503 = vmul.f32 %v230, %v497
      %v504 = vmul.f32 %v231, %v497
      %v505 = vmul.f32 %v232, %v497
      %v506 = vmul.f32 %v233, %v497
      %v507 = vmul.f32 %v234, %v497
      %v508 = vmul.f32 %v235, %v497
      %v509 = vmul.f32 %v236, %v497
      %v510 = vmul.f32 %v237, %v497
      %v511 = vmul.f32 %v238, %v497
      %v512 = vmul.f32 %v239, %v497
      %v513 = vmul.f32 %v240, %v497
      %v514 = vmul.f32 %v241, %v497
      %v515 = vmul.f32 %v242, %v497
      %v516 = vmul.f32 %v243, %v497
      %v517 = vmul.f32 %v244, %v497
      %v518 = vmul.f32 %v245, %v497
      %v519 = vmul.f32 %v246, %v497
      %v520 = vmul.f32 %v247, %v497
      %v521 = vmul.f32 %v248, %v497
      %v522 = vmul.f32 %v249, %v497
      %v523 = vmul.f32 %v250, %v497
      %v524 = vmul.f32 %v251, %v497
      %v525 = vmul.f32 %v252, %v497
      %v526 = vmul.f32 %v253, %v497
      %v527 = vmul.f32 %v254, %v497
      %v528 = vmul.f32 %v255, %v497
      %v529 = vmul.f32 %v256, %v497
      %530 = vst.msk [vmem:[%s224] sm:$0xff] %vm257, %v498
      %531 = vst.msk [vmem:[%s224 + $0x8] sm:$0xff] %vm257, %v499
      %532 = vst.msk [vmem:[%s224 + $0x10] sm:$0xff] %vm257, %v500
      %533 = vst.msk [vmem:[%s224 + $0x18] sm:$0xff] %vm257, %v501
      %534 = vst.msk [vmem:[%s224 + $0x20] sm:$0xff] %vm257, %v502
      %535 = vst.msk [vmem:[%s224 + $0x28] sm:$0xff] %vm257, %v503
      %536 = vst.msk [vmem:[%s224 + $0x30] sm:$0xff] %vm257, %v504
      %537 = vst.msk [vmem:[%s224 + $0x38] sm:$0xff] %vm257, %v505
      %538 = vst.msk [vmem:[%s224 + $0x40] sm:$0xff] %vm257, %v506
      %539 = vst.msk [vmem:[%s224 + $0x48] sm:$0xff] %vm257, %v507
      %540 = vst.msk [vmem:[%s224 + $0x50] sm:$0xff] %vm257, %v508
      %541 = vst.msk [vmem:[%s224 + $0x58] sm:$0xff] %vm257, %v509
      %542 = vst.msk [vmem:[%s224 + $0x60] sm:$0xff] %vm257, %v510
      %543 = vst.msk [vmem:[%s224 + $0x68] sm:$0xff] %vm257, %v511
      %544 = vst.msk [vmem:[%s224 + $0x70] sm:$0xff] %vm257, %v512
      %545 = vst.msk [vmem:[%s224 + $0x78] sm:$0xff] %vm257, %v513
      %546 = vst.msk [vmem:[%s224 + $0x80] sm:$0xff] %vm257, %v514
      %547 = vst.msk [vmem:[%s224 + $0x88] sm:$0xff] %vm257, %v515
      %548 = vst.msk [vmem:[%s224 + $0x90] sm:$0xff] %vm257, %v516
      %549 = vst.msk [vmem:[%s224 + $0x98] sm:$0xff] %vm257, %v517
      %550 = vst.msk [vmem:[%s224 + $0xa0] sm:$0xff] %vm257, %v518
      %551 = vst.msk [vmem:[%s224 + $0xa8] sm:$0xff] %vm257, %v519
      %552 = vst.msk [vmem:[%s224 + $0xb0] sm:$0xff] %vm257, %v520
      %553 = vst.msk [vmem:[%s224 + $0xb8] sm:$0xff] %vm257, %v521
      %554 = vst.msk [vmem:[%s224 + $0xc0] sm:$0xff] %vm257, %v522
      %555 = vst.msk [vmem:[%s224 + $0xc8] sm:$0xff] %vm257, %v523
      %556 = vst.msk [vmem:[%s224 + $0xd0] sm:$0xff] %vm257, %v524
      %557 = vst.msk [vmem:[%s224 + $0xd8] sm:$0xff] %vm257, %v525
      %558 = vst.msk [vmem:[%s224 + $0xe0] sm:$0xff] %vm257, %v526
      %559 = vst.msk [vmem:[%s224 + $0xe8] sm:$0xff] %vm257, %v527
      %560 = vst.msk [vmem:[%s224 + $0xf0] sm:$0xff] %vm257, %v528
      %561 = vst.msk [vmem:[%s224 + $0xf8] sm:$0xff] %vm257, %v529
      %p562 = scmp.lt.s32.totalorder %s16, 1
      %s563 = scalar_select %p562, %s16, 1
      %s564 = smul.addr %s563, 32
      %s565 = smul.addr %s564, 8
      %s566 = scalar_lea.vmem %s5, %s565
      // Predicated region
      $region41: #{tpu_custom_call.1} parent=39 // pred_check
        %p567 = pneg %p144
      $region42: #{tpu_custom_call.1} parent=39 // pred_check_branch
        %569 = sbr.rel (%p567) target = $region44
      $region43: #{tpu_custom_call.1} parent=39 // pred_region
        _
      $region44: #{tpu_custom_call.1} parent=39 // pred_fallthru
        _
    $region40: #{tpu_custom_call.1} parent=5 // pred_fallthru
      _
    %p570 = scmp.le.s32.totalorder 2, %s11
    // Predicated region
    $region45: #{tpu_custom_call.1} parent=5 // pred_check
      %p571 = pneg %p570
    $region46: #{tpu_custom_call.1} parent=5 // pred_check_branch
      %573 = sbr.rel (%p571) target = $region48
    $region47: #{tpu_custom_call.1} parent=5 // pred_region
      %s574 = ssub.s32 %s11, 2
      // Predicated region
      $region49: #{tpu_custom_call.1} parent=47 // pred_check
        %p575 = pneg %p150
      $region50: #{tpu_custom_call.1} parent=47 // pred_check_branch
        %577 = sbr.rel (%p575) target = $region52
      $region51: #{tpu_custom_call.1} parent=47 // pred_region
        %p578 = scmp.lt.s32.totalorder %s17, 1
        %s579 = scalar_select %p578, %s17, 1
        %s580 = smul.addr %s579, 32
        %s581 = smul.addr %s580, 8
        %s582 = scalar_lea.vmem %s5, %s581
      $region52: #{tpu_custom_call.1} parent=47 // pred_fallthru
        _
    $region48: #{tpu_custom_call.1} parent=5 // pred_fallthru
      _
  $region6: #{tpu_custom_call.1} parent=0 // loop_footer
    %s15 = sadd.s32 1, %s11
  $region7: #{tpu_custom_call.1} parent=0 // loop_footer_branch
    %10 = sbr.rel target = $region3
  $region8: #{tpu_custom_call.1} parent=0 // loop_exit
    _

</llo_original>
